<compile_context>
chip_gen: v6e
topology: v6e:2x2x1
jax: 0.10.0
libtpu: 0.0.40
codegen_flags: <defaults>
</compile_context>

<pallas_src>
import math
from functools import partial

import jax
import jax.numpy as jnp
from jax import lax
from jax.experimental import pallas as pl
from jax.experimental.pallas import tpu as pltpu


def _round_up(n: int, m: int) -> int:
    return ((n + m - 1) // m) * m


def _vq_kernel(y_ref, e_ref, hesq_ref, q_ref, *, compute_dtype):
    """One batch tile of vector quantization.

    y_ref    : (TB, D) flattened input tile (native dtype; cast in-kernel)
    e_ref    : (D, N)  codebook in torch layout (resident across grid steps)
    hesq_ref : (1, N)  0.5 * sum(E*E, axis=0), f32 (resident)
    q_ref    : (TB, D) quantized output tile
    """
    y = y_ref[...].astype(compute_dtype)                     # VPU cast, hidden under DMA
    e = e_ref[...]                                           # (D, N) in compute dtype

    # argmin(-2*y@E + |y|^2 + |E|^2) == argmin(0.5*|E|^2 - y@E): |y|^2 is a
    # per-row constant and drops out of the ranking.
    cross = jnp.dot(y, e, preferred_element_type=jnp.float32)        # (TB, N) MXU
    score = hesq_ref[...] - cross                                    # (TB, N) f32
    idx = jnp.argmin(score, axis=1)                                  # (TB,) first-index ties (matches torch)

    lane = jax.lax.broadcasted_iota(jnp.int32, score.shape, 1)       # (TB, N)
    onehot = (lane == idx[:, None]).astype(e.dtype)                  # (TB, N)

    # quantized = onehot @ E^T expressed as a last-with-last contraction so the
    # single (D, N) codebook copy serves both matmuls (no transposed copy).
    q = lax.dot_general(onehot, e, (((1,), (1,)), ((), ())),
                        preferred_element_type=jnp.float32)          # (TB, D) MXU
    q_ref[...] = q.astype(q_ref.dtype)


def _choose_batch_tile(B: int, block_b: int) -> int:
    """Batch tile: multiple of 8, <= block_b, and >= 2 grid steps when possible."""
    if B <= 8:
        return _round_up(max(B, 1), 8)
    return max(8, min(block_b, _round_up((B + 1) // 2, 8)))


def vq_quantize(x: jax.Array, embeddings: jax.Array, *,
                block_b: int = 512, use_bf16_matmul=None) -> jax.Array:
    """Pallas forward pass of vaeVectorQuantizer.

    x          : any shape (B, ...) with prod(shape[1:]) == dEmbedding
    embeddings : (dEmbedding, nEmbeddings), torch parameter layout
    returns    : quantized tensor with the same shape/dtype as x
    """
    input_shape = x.shape
    B = int(input_shape[0])
    D = int(math.prod(input_shape[1:]))
    dE, nE = embeddings.shape
    assert D == dE, f"flattened dim {D} must equal dEmbedding {dE}"

    if use_bf16_matmul is None:
        use_bf16_matmul = (x.dtype == jnp.bfloat16)
    compute_dtype = jnp.bfloat16 if use_bf16_matmul else jnp.float32

    tb = _choose_batch_tile(B, block_b)
    B_pad = _round_up(B, tb)

    # Flattened view in the native dtype; pad only the tail rows if needed.
    y = x.reshape(B, D)
    if B_pad != B:
        y = jnp.pad(y, ((0, B_pad - B), (0, 0)))

    # Hoisted codebook preprocessing (once per call, resident across grid steps).
    e_cb = embeddings.astype(compute_dtype)                              # (D, N)
    e_f32 = embeddings.astype(jnp.float32)
    half_e_sq = 0.5 * jnp.sum(e_f32 * e_f32, axis=0, keepdims=True)      # (1, N) f32

    grid = (B_pad // tb,)

    in_itemsize = x.dtype.itemsize
    cb_itemsize = jnp.dtype(compute_dtype).itemsize
    flops = 4 * B_pad * D * nE                     # two matmul passes per row
    bytes_accessed = (
        B_pad * D * in_itemsize                    # y in
        + D * nE * cb_itemsize                     # codebook (single copy)
        + nE * 4                                   # 0.5*|E|^2
        + B_pad * D * in_itemsize                  # output
    )

    # Scoped VMEM budget: double-buffered y/out tiles, resident codebook
    # (Pallas may allocate 2 buffers even for a constant index map), the
    # (TB, N) f32 temporaries, plus headroom.
    vmem_est = (
        2 * tb * D * in_itemsize                   # y tiles
        + 2 * tb * D * in_itemsize                 # out tiles
        + 2 * D * nE * cb_itemsize                 # codebook buffers
        + 2 * nE * 4                               # half_e_sq
        + 6 * tb * nE * 4                          # cross/score/iota/onehot temporaries
        + (4 << 20)                                # headroom
    )
    vmem_limit = int(min(max(vmem_est, 32 << 20), 100 << 20))

    kernel = partial(_vq_kernel, compute_dtype=compute_dtype)

    quantized_flat = pl.pallas_call(
        kernel,
        out_shape=jax.ShapeDtypeStruct((B_pad, D), x.dtype),
        grid_spec=pltpu.PrefetchScalarGridSpec(
            num_scalar_prefetch=0,
            grid=grid,
            in_specs=[
                pl.BlockSpec((tb, D), lambda i: (i, 0)),    # y tile
                pl.BlockSpec((dE, nE), lambda i: (0, 0)),   # codebook (resident)
                pl.BlockSpec((1, nE), lambda i: (0, 0)),    # 0.5*|E|^2 (resident)
            ],
            out_specs=pl.BlockSpec((tb, D), lambda i: (i, 0)),
        ),
        compiler_params=pltpu.CompilerParams(
            dimension_semantics=("parallel",),
            vmem_limit_bytes=vmem_limit,
        ),
        cost_estimate=pl.CostEstimate(
            flops=flops, transcendentals=0, bytes_accessed=bytes_accessed
        ),
    )(y, e_cb, half_e_sq)

    if B_pad != B:
        quantized_flat = quantized_flat[:B]
    return quantized_flat.reshape(input_shape)


def _reference(x, embeddings):
    """Pure-JAX reference mirroring the PyTorch module."""
    B = x.shape[0]
    y = x.reshape(B, -1).astype(jnp.float32)
    e = embeddings.astype(jnp.float32)
    dist = -2.0 * (y @ e)
    dist += jnp.sum(y * y, axis=1, keepdims=True)
    dist += jnp.sum(e * e, axis=0, keepdims=True)
    idx = jnp.argmin(dist, axis=1)
    onehot = jax.nn.one_hot(idx, e.shape[1], dtype=e.dtype)
    q = onehot @ e.T
    return q.reshape(x.shape).astype(x.dtype)


if __name__ == "__main__":
    # Module hyperparameters (small, MXU/VPU-aligned shapes)
    nEmbeddings = 128
    dEmbeddings = 128

    # Input: NCHW with C*H*W == dEmbeddings  ->  (16, 2, 8, 8)
    B, C, H, W = 16, 2, 8, 8
    assert C * H * W == dEmbeddings

    key = jax.random.PRNGKey(0)
    kx, ke = jax.random.split(key)
    x = jax.random.normal(kx, (B, C, H, W), dtype=jnp.float32)

    # Deterministic init matching torch uniform_(-sqrt(3), sqrt(3))
    lim = 3.0 ** 0.5
    embeddings = jax.random.uniform(
        ke, (dEmbeddings, nEmbeddings), dtype=jnp.float32, minval=-lim, maxval=lim
    )

    out = vq_quantize(x, embeddings)
    out = jax.block_until_ready(out)

    ref = _reference(x, embeddings)
    assert out.shape == x.shape and out.dtype == x.dtype
    assert jnp.allclose(out, ref, atol=1e-4, rtol=1e-4), "mismatch vs reference"

    print("KERNEL_OK")
</pallas_src>

<mosaic_0001>
module attributes {stable_mosaic.version = 11 : i64} {
  func.func @_vq_kernel(%arg0: i32, %arg1: memref<8x128xf32, #tpu.memory_space<vmem>>, %arg2: memref<128x128xf32, #tpu.memory_space<vmem>>, %arg3: memref<1x128xf32, #tpu.memory_space<vmem>>, %arg4: memref<8x128xf32, #tpu.memory_space<vmem>>) attributes {dimension_semantics = [#tpu.dimension_semantics<parallel>], iteration_bounds = array<i64: 2>, scalar_prefetch = 0 : i64, scratch_operands = 0 : i64, tpu.core_type = #tpu.core_type<tc>, window_params = [{transform_indices = @transform_0, window_bounds = array<i64: 8, 128>}, {pipeline_mode = #tpu.pipeline_mode<synchronous>, transform_indices = @transform_1, window_bounds = array<i64: 128, 128>}, {pipeline_mode = #tpu.pipeline_mode<synchronous>, transform_indices = @transform_2, window_bounds = array<i64: 1, 128>}, {transform_indices = @transform_3, window_bounds = array<i64: 8, 128>}]} {
    %c0 = arith.constant 0 : index
    %c0_0 = arith.constant 0 : index
    %0 = vector.load %arg1[%c0, %c0_0] : memref<8x128xf32, #tpu.memory_space<vmem>>, vector<8x128xf32>
    %c0_1 = arith.constant 0 : index
    %c0_2 = arith.constant 0 : index
    %1 = vector.load %arg2[%c0_1, %c0_2] : memref<128x128xf32, #tpu.memory_space<vmem>>, vector<128x128xf32>
    %cst = arith.constant dense<0.000000e+00> : vector<8x128xf32>
    %2 = tpu.matmul %0, %1, %cst {dimension_numbers = #tpu.dot_dimension_numbers<[1], [0], [0], [1], [0, 0, 1, 1], [], []>} : vector<8x128xf32>, vector<128x128xf32>, vector<8x128xf32> -> vector<8x128xf32>
    %c0_3 = arith.constant 0 : index
    %c0_4 = arith.constant 0 : index
    %3 = vector.load %arg3[%c0_3, %c0_4] : memref<1x128xf32, #tpu.memory_space<vmem>>, vector<1x128xf32>
    %4 = vector.broadcast %3 : vector<1x128xf32> to vector<8x128xf32>
    %5 = arith.subf %4, %2 : vector<8x128xf32>
    %6 = tpu.reduce_index %5 {axis = 1 : i32, kind = #tpu.reduction_kind<arg_min>} : vector<8x128xf32> -> vector<8xi32>
    %7 = tpu.iota {dimensions = array<i32: 1>} : vector<8x128xi32>
    %8 = vector.shape_cast %6 : vector<8xi32> to vector<8x1xi32>
    %9 = vector.broadcast %8 : vector<8x1xi32> to vector<8x128xi32>
    %10 = arith.cmpi eq, %7, %9 : vector<8x128xi32>
    %11 = arith.extui %10 : vector<8x128xi1> to vector<8x128xi32>
    %12 = arith.sitofp %11 : vector<8x128xi32> to vector<8x128xf32>
    %cst_5 = arith.constant dense<0.000000e+00> : vector<8x128xf32>
    %13 = tpu.matmul %12, %1, %cst_5 {dimension_numbers = #tpu.dot_dimension_numbers<[1], [1], [0], [0], [0, 0, 1, 0], [], []>} : vector<8x128xf32>, vector<128x128xf32>, vector<8x128xf32> -> vector<8x128xf32>
    %c0_6 = arith.constant 0 : index
    %c0_7 = arith.constant 0 : index
    %14 = vector.load %arg4[%c0_6, %c0_7] : memref<8x128xf32, #tpu.memory_space<vmem>>, vector<8x128xf32>
    tpu.vector_store %arg4[%c0_6, %c0_7], %13 {strides = array<i32>} : memref<8x128xf32, #tpu.memory_space<vmem>>, vector<8x128xf32>,
    return
  }
  func.func @transform_0(%arg0: i32) -> (i32, i32) {
    %c0_i32 = arith.constant 0 : i32
    %c0_i32_0 = arith.constant 0 : i32
    return %arg0, %c0_i32 : i32, i32
  }
  func.func @transform_1(%arg0: i32) -> (i32, i32) {
    %c0_i32 = arith.constant 0 : i32
    %c0_i32_0 = arith.constant 0 : i32
    %c0_i32_1 = arith.constant 0 : i32
    return %c0_i32, %c0_i32_0 : i32, i32
  }
  func.func @transform_2(%arg0: i32) -> (i32, i32) {
    %c0_i32 = arith.constant 0 : i32
    %c0_i32_0 = arith.constant 0 : i32
    %c0_i32_1 = arith.constant 0 : i32
    return %c0_i32, %c0_i32_0 : i32, i32
  }
  func.func @transform_3(%arg0: i32) -> (i32, i32) {
    %c0_i32 = arith.constant 0 : i32
    %c0_i32_0 = arith.constant 0 : i32
    return %arg0, %c0_i32 : i32, i32
  }
}

</mosaic_0001>

<llo_original>
// kernel: tpu_custom_call.1
$region0: #{tpu_custom_call.1}
  #allocation0 [shape = 'u32[]', space=smem, size = 0x4, offset = 0x4, fixed_abs, tag = 'smem constant byte address 0x4 - core index']
  #allocation1 [shape = 'u32[144,128]{1,0:T(1,128)}', space=vmem, size = 0x12000, scoped, tag = 'internal scratch']
  %s0 = inlined_call_operand.hbm [shape: f32[16,128], index: 0, kind: input, shape index: {}]
  %s1 = inlined_call_operand.hbm [shape: f32[128,128], index: 1, kind: input, shape index: {}]
  %s2 = inlined_call_operand.vmem [shape: f32[1,128], index: 2, kind: input, shape index: {}]
  %s3 = inlined_call_operand.hbm [shape: f32[16,128], index: 3, kind: output, shape index: {}]
  %s4 = sld [smem:[#allocation0]]
  $region53: #{tpu_custom_call.1} parent=0
    _
  %s6 = ssub.s32 1, %s4
  %s7 = scalar_select 0, %s6, %s4
  $region1: #{tpu_custom_call.1} parent=0
    #allocation2 [shape = 'u8[8192]{0}', space=vmem, size = 0x2000, scoped, tag = 'input window, operand 0']
    #allocation3 [shape = 's32[2]{0}', space=sflag, size = 0x8, scoped, tag = 'scoped memory for tpu_custom_call.1']
    #allocation4 [shape = 's32[2]{0}', space=sflag, size = 0x8, scoped, tag = 'scoped memory for tpu_custom_call.1']
    #allocation5 [shape = 'u8[65536]{0}', space=vmem, size = 0x10000, scoped, tag = 'input window, operand 1, single buffered']
    #allocation6 [shape = 's32[1]{0}', space=sflag, size = 0x4, scoped, tag = 'scoped memory for tpu_custom_call.1']
    #allocation7 [shape = 'u8[8192]{0}', space=vmem, size = 0x2000, scoped, tag = 'output window, operand 0']
    %8 = vsyncpa [#allocation3], 0
    %s9 = scalar_lea.sflag [#allocation3], 1
    %10 = vsyncpa %s9, 0
    %11 = vsyncpa [#allocation6], 0
    %12 = vsyncpa [#allocation4], 0
    %s13 = scalar_lea.sflag [#allocation4], 1
    %14 = vsyncpa %s13, 0
    loop: start=0, step=1, limit=4
    $region2: #{tpu_custom_call.1} parent=1 // loop_pre_header
      _
    $region3: #{tpu_custom_call.1} parent=1 // loop_header
      %s16 = sphi 0, %s20
      %p17 = scmp.ge.s32.totalorder %s16, 4
      %s26 = sphi 0, %s28
      %s29 = sphi 0, %s26
      %s30 = sphi 0, %s29
      %s46 = sphi 0, %s30
      %s50 = sphi 0, %s50
      %s52 = sphi 0, %s50
      %s53 = sphi 0, %s52
      %s67 = sphi 0, %s53
      %s71 = sphi 0, %s71
      %s73 = sphi 0, %s71
      %s74 = sphi 0, %s73
      %s88 = sphi 0, %s74
      %s94 = sphi 0, %s96
      %s97 = sphi 0, %s94
      %s98 = sphi 0, %s97
      %s114 = sphi 0, %s98
    $region4: #{tpu_custom_call.1} parent=1 // loop_header_branch
      %19 = sbr.rel (%p17) target = $region8
    $region5: #{tpu_custom_call.1} parent=1 // loop_body
      %s21 = ssub.s32 %s16, 1
      %s22 = ssub.s32 %s16, 2
      %s23 = sadd.s32 %s16, 1
      %s24 = ssub.s32 %s16, %s23
      %p25 = scmp.eq.s32.totalorder %s24, 0
      %s27 = sadd.s32 %s26, 1
      %s28 = scalar_select %p25, %s26, %s27
      %p31 = pneg %p25
      %p32 = scmp.eq.s32.totalorder %s16, 1
      %p33 = por %p31, %p32
      %p34 = scmp.ne.s32.totalorder %s26, %s29
      %p35 = scmp.eq.s32.totalorder %s16, 0
      %p36 = por %p34, %p35
      %p37 = scmp.ne.s32.totalorder %s26, %s29
      %p38 = scmp.eq.s32.totalorder %s21, 1
      %p39 = por %p37, %p38
      %p40 = scmp.ne.s32.totalorder %s29, %s30
      %p41 = scmp.eq.s32.totalorder %s21, 0
      %p42 = por %p40, %p41
      %p43 = scmp.ne.s32.totalorder %s29, %s30
      %p44 = scmp.eq.s32.totalorder %s22, 1
      %p45 = por %p43, %p44
      %p47 = scmp.ne.s32.totalorder %s30, %s46
      %p48 = scmp.eq.s32.totalorder %s22, 0
      %p49 = por %p47, %p48
      %s51 = sadd.s32 %s50, 1
      %p54 = scmp.eq.s32.totalorder %s16, 1
      %p55 = scmp.ne.s32.totalorder %s50, %s52
      %p56 = scmp.eq.s32.totalorder %s16, 0
      %p57 = por %p55, %p56
      %p58 = scmp.ne.s32.totalorder %s50, %s52
      %p59 = scmp.eq.s32.totalorder %s21, 1
      %p60 = por %p58, %p59
      %p61 = scmp.ne.s32.totalorder %s52, %s53
      %p62 = scmp.eq.s32.totalorder %s21, 0
      %p63 = por %p61, %p62
      %p64 = scmp.ne.s32.totalorder %s52, %s53
      %p65 = scmp.eq.s32.totalorder %s22, 1
      %p66 = por %p64, %p65
      %p68 = scmp.ne.s32.totalorder %s53, %s67
      %p69 = scmp.eq.s32.totalorder %s22, 0
      %p70 = por %p68, %p69
      %s72 = sadd.s32 %s71, 1
      %p75 = scmp.eq.s32.totalorder %s16, 1
      %p76 = scmp.ne.s32.totalorder %s71, %s73
      %p77 = scmp.eq.s32.totalorder %s16, 0
      %p78 = por %p76, %p77
      %p79 = scmp.ne.s32.totalorder %s71, %s73
      %p80 = scmp.eq.s32.totalorder %s21, 1
      %p81 = por %p79, %p80
      %p82 = scmp.ne.s32.totalorder %s73, %s74
      %p83 = scmp.eq.s32.totalorder %s21, 0
      %p84 = por %p82, %p83
      %p85 = scmp.ne.s32.totalorder %s73, %s74
      %p86 = scmp.eq.s32.totalorder %s22, 1
      %p87 = por %p85, %p86
      %p89 = scmp.ne.s32.totalorder %s74, %s88
      %p90 = scmp.eq.s32.totalorder %s22, 0
      %p91 = por %p89, %p90
      %s92 = ssub.s32 %s16, %s23
      %p93 = scmp.eq.s32.totalorder %s92, 0
      %s95 = sadd.s32 %s94, 1
      %s96 = scalar_select %p93, %s94, %s95
      %p99 = pneg %p93
      %p100 = scmp.eq.s32.totalorder %s16, 1
      %p101 = por %p99, %p100
      %p102 = scmp.ne.s32.totalorder %s94, %s97
      %p103 = scmp.eq.s32.totalorder %s16, 0
      %p104 = por %p102, %p103
      %p105 = scmp.ne.s32.totalorder %s94, %s97
      %p106 = scmp.eq.s32.totalorder %s21, 1
      %p107 = por %p105, %p106
      %p108 = scmp.ne.s32.totalorder %s97, %s98
      %p109 = scmp.eq.s32.totalorder %s21, 0
      %p110 = por %p108, %p109
      %p111 = scmp.ne.s32.totalorder %s97, %s98
      %p112 = scmp.eq.s32.totalorder %s22, 1
      %p113 = por %p111, %p112
      %p115 = scmp.ne.s32.totalorder %s98, %s114
      %p116 = scmp.eq.s32.totalorder %s22, 0
      %p117 = por %p115, %p116
      %p118 = scmp.le.s32.totalorder 1, %s16
      %p119 = scmp.lt.s32.totalorder %s16, 3
      %p120 = pnand %p118, %p119
      %p121 = pneg %p120
      // Predicated region
      $region9: #{tpu_custom_call.1} parent=5 // pred_check
        _
      $region10: #{tpu_custom_call.1} parent=5 // pred_check_branch
        %123 = sbr.rel (%p120) target = $region12
      $region11: #{tpu_custom_call.1} parent=5 // pred_region
        %s124 = ssub.s32 %s16, 1
        // Predicated region
        $region13: #{tpu_custom_call.1} parent=11 // pred_check
          %p125 = pneg %p63
        $region14: #{tpu_custom_call.1} parent=11 // pred_check_branch
          %127 = sbr.rel (%p125) target = $region16
        $region15: #{tpu_custom_call.1} parent=11 // pred_region
          %s129 = ssub.s32 2048, 2048
          %130 = vsyncadd [#allocation6], %s129
          %s131 = sshll.u32 [#allocation5], 4
          %s132 = int_to_ptr.vmem [resolvable:$true] %s131
          %137 = dma.hbm_to_vmem [thread:$0]  %s1, 2048, %s132, [#allocation6], 128, 128, 8
        $region16: #{tpu_custom_call.1} parent=11 // pred_fallthru
          _
        // Predicated region
        $region17: #{tpu_custom_call.1} parent=11 // pred_check
          %p138 = pneg %p84
        $region18: #{tpu_custom_call.1} parent=11 // pred_check_branch
          %140 = sbr.rel (%p138) target = $region20
        $region19: #{tpu_custom_call.1} parent=11 // pred_region
          _
        $region20: #{tpu_custom_call.1} parent=11 // pred_fallthru
          _
      $region12: #{tpu_custom_call.1} parent=5 // pred_fallthru
        _
      %p141 = scmp.lt.s32.totalorder %s16, 2
      // Predicated region
      $region21: #{tpu_custom_call.1} parent=5 // pred_check
        %p142 = pneg %p141
      $region22: #{tpu_custom_call.1} parent=5 // pred_check_branch
        %144 = sbr.rel (%p142) target = $region24
      $region23: #{tpu_custom_call.1} parent=5 // pred_region
        // Predicated region
        $region25: #{tpu_custom_call.1} parent=23 // pred_check
          %p145 = pneg %p36
        $region26: #{tpu_custom_call.1} parent=23 // pred_check_branch
          %147 = sbr.rel (%p145) target = $region28
        $region27: #{tpu_custom_call.1} parent=23 // pred_region
          %s148 = sand.u32 %s26, 1
          %s149 = scalar_lea.sflag [#allocation3], %s148
          %s150 = sand.u32 %s26, 1
          %s151 = smul.addr %s150, 8
          %s152 = scalar_lea.vmem [#allocation2], %s151
          %s154 = ssub.s32 128, 128
          %155 = vsyncadd %s149, %s154
          %s156 = smul.addr %s16, 128
          %s157 = scalar_lea.hbm %s0, %s156
          %s159 = sshll.u32 %s152, 4
          %s160 = int_to_ptr.vmem [resolvable:$true] %s159
          %162 = dma.hbm_to_vmem [thread:$0]  %s157, 128, %s160, %s149
        $region28: #{tpu_custom_call.1} parent=23 // pred_fallthru
          _
      $region24: #{tpu_custom_call.1} parent=5 // pred_fallthru
        _
      %p163 = scmp.le.s32.totalorder 1, %s16
      %p164 = scmp.lt.s32.totalorder %s16, 3
      %p165 = pnand %p163, %p164
      %p166 = pneg %p165
      // Predicated region
      $region29: #{tpu_custom_call.1} parent=5 // pred_check
        _
      $region30: #{tpu_custom_call.1} parent=5 // pred_check_branch
        %168 = sbr.rel (%p165) target = $region32
      $region31: #{tpu_custom_call.1} parent=5 // pred_region
        %s169 = ssub.s32 %s16, 1
        %s170 = sand.u32 %s29, 1
        %s171 = scalar_lea.sflag [#allocation3], %s170
        %s172 = sand.u32 %s29, 1
        %s173 = smul.addr %s172, 8
        %s174 = scalar_lea.vmem [#allocation2], %s173
        // Predicated region
        $region33: #{tpu_custom_call.1} parent=31 // pred_check
          %p175 = pneg %p42
        $region34: #{tpu_custom_call.1} parent=31 // pred_check_branch
          %177 = sbr.rel (%p175) target = $region36
        $region35: #{tpu_custom_call.1} parent=31 // pred_region
          %178 = dma.done %s171, 128
        $region36: #{tpu_custom_call.1} parent=31 // pred_fallthru
          _
        // Predicated region
        $region37: #{tpu_custom_call.1} parent=31 // pred_check
          %p179 = pneg %p63
        $region38: #{tpu_custom_call.1} parent=31 // pred_check_branch
          %181 = sbr.rel (%p179) target = $region40
        $region39: #{tpu_custom_call.1} parent=31 // pred_region
          %182 = dma.done [#allocation6], 2048
        $region40: #{tpu_custom_call.1} parent=31 // pred_fallthru
          _
        %s183 = sand.u32 %s29, 1
        %s184 = scalar_lea.sflag [#allocation3], %s183
        %s185 = sand.u32 %s29, 1
        %s186 = smul.addr %s185, 8
        %s187 = scalar_lea.vmem [#allocation2], %s186
        %p188 = pneg %p42
        %p189 = pneg %p39
        %p190 = pneg %p63
        %p191 = pneg %p60
        %p192 = pneg %p84
        %p193 = pneg %p81
        %p194 = pneg %p110
        %p195 = pneg %p107
        %s196 = sand.u32 %s97, 1
        %s197 = scalar_lea.sflag [#allocation4], %s196
        %s198 = sand.u32 %s97, 1
        %s199 = smul.addr %s198, 8
        %s200 = scalar_lea.vmem [#allocation7], %s199
        %v201 = vld [vmem:[%s174] sm:$0xff]
        %v202 = vld [vmem:[#allocation5] sm:$0xff]
        %v203 = vld [vmem:[#allocation5 + $0x8] sm:$0xff]
        %v204 = vld [vmem:[#allocation5 + $0x10] sm:$0xff]
        %v205 = vld [vmem:[#allocation5 + $0x18] sm:$0xff]
        %v206 = vld [vmem:[#allocation5 + $0x20] sm:$0xff]
        %v207 = vld [vmem:[#allocation5 + $0x28] sm:$0xff]
        %v208 = vld [vmem:[#allocation5 + $0x30] sm:$0xff]
        %v209 = vld [vmem:[#allocation5 + $0x38] sm:$0xff]
        %v210 = vld [vmem:[#allocation5 + $0x40] sm:$0xff]
        %v211 = vld [vmem:[#allocation5 + $0x48] sm:$0xff]
        %v212 = vld [vmem:[#allocation5 + $0x50] sm:$0xff]
        %v213 = vld [vmem:[#allocation5 + $0x58] sm:$0xff]
        %v214 = vld [vmem:[#allocation5 + $0x60] sm:$0xff]
        %v215 = vld [vmem:[#allocation5 + $0x68] sm:$0xff]
        %v216 = vld [vmem:[#allocation5 + $0x70] sm:$0xff]
        %v217 = vld [vmem:[#allocation5 + $0x78] sm:$0xff]
        %218 = vmatprep.subr.mxu0 0.0
        %219 = vmatpush1.msra.mxu0 %v217
        %220 = vmatprep.subr.mxu0 0.0
        %221 = vmatpush1.msra.mxu0 %v216
        %222 = vmatprep.subr.mxu0 0.0
        %223 = vmatpush1.msra.mxu0 %v215
        %224 = vmatprep.subr.mxu0 0.0
        %225 = vmatpush1.msra.mxu0 %v214
        %226 = vmatprep.subr.mxu0 0.0
        %227 = vmatpush1.msra.mxu0 %v213
        %228 = vmatprep.subr.mxu0 0.0
        %229 = vmatpush1.msra.mxu0 %v212
        %230 = vmatprep.subr.mxu0 0.0
        %231 = vmatpush1.msra.mxu0 %v211
        %232 = vmatprep.subr.mxu0 0.0
        %233 = vmatpush1.msra.mxu0 %v210
        %234 = vmatprep.subr.mxu0 0.0
        %235 = vmatpush1.msra.mxu0 %v209
        %236 = vmatprep.subr.mxu0 0.0
        %237 = vmatpush1.msra.mxu0 %v208
        %238 = vmatprep.subr.mxu0 0.0
        %239 = vmatpush1.msra.mxu0 %v207
        %240 = vmatprep.subr.mxu0 0.0
        %241 = vmatpush1.msra.mxu0 %v206
        %242 = vmatprep.subr.mxu0 0.0
        %243 = vmatpush1.msra.mxu0 %v205
        %244 = vmatprep.subr.mxu0 0.0
        %245 = vmatpush1.msra.mxu0 %v204
        %246 = vmatprep.subr.mxu0 0.0
        %247 = vmatpush1.msra.mxu0 %v203
        %248 = vmatprep.subr.mxu0 0.0
        %249 = vmatpush1.msra.mxu0 %v202
        %250 = vmatprep.subr.mxu0 0.0
        %251 = vmatpush2.msra.mxu0 0.0
        %252 = vmatprep.subr.mxu0 0.0
        %253 = vmatpush2.msra.mxu0 0.0
        %254 = vmatprep.subr.mxu0 0.0
        %255 = vmatpush2.msra.mxu0 0.0
        %256 = vmatprep.subr.mxu0 0.0
        %257 = vmatpush2.msra.mxu0 0.0
        %258 = vmatprep.subr.mxu0 0.0
        %259 = vmatpush2.msra.mxu0 0.0
        %260 = vmatprep.subr.mxu0 0.0
        %261 = vmatpush2.msra.mxu0 0.0
        %262 = vmatprep.subr.mxu0 0.0
        %263 = vmatpush2.msra.mxu0 0.0
        %264 = vmatprep.subr.mxu0 0.0
        %265 = vmatpush2.msra.mxu0 0.0
        %266 = vmatprep.subr.mxu0 0.0
        %267 = vmatpush2.msra.mxu0 0.0
        %268 = vmatprep.subr.mxu0 0.0
        %269 = vmatpush2.msra.mxu0 0.0
        %270 = vmatprep.subr.mxu0 0.0
        %271 = vmatpush2.msra.mxu0 0.0
        %272 = vmatprep.subr.mxu0 0.0
        %273 = vmatpush2.msra.mxu0 0.0
        %274 = vmatprep.subr.mxu0 0.0
        %275 = vmatpush2.msra.mxu0 0.0
        %276 = vmatprep.subr.mxu0 0.0
        %277 = vmatpush2.msra.mxu0 0.0
        %278 = vmatprep.subr.mxu0 0.0
        %279 = vmatpush2.msra.mxu0 0.0
        %280 = vmatprep.subr.mxu0 0.0
        %281 = vmatpush2.msra.mxu0 0.0
        %282 = vmatprep.mubr.f32.mxu0 0.0
        %283 = vmatmul.mubr.f32.gmra.mxu0 %v201
        %v284 = vpop.f32.mrf.mxu0
        %v285 = vadd.f32 0.0, %v284
        %v286 = vpop.f32.mrf.mxu0
        %287 = vdwg.mxu0
        %v288 = vld [vmem:[%s2] sm:$0x1]
        %v290 = vlaneseq
        %v291 = vshrl.u32 %v290, 7
        %v292 = vsub.s32 0, %v291
        %v293 = vrot.slane %v288, %v292
        %v295 = vsub.f32 %v293, %v285
        %296 = vmin.index.xlane.f32.xlu0 %v295
        %v297 = vpop.xlane.xlu0 %296
        %v298 = vlaneseq
        %v299 = vand.u32 %v298, 127
        %vm300 = vcmp.eq.s32.totalorder %v299, %v297
        %v301 = vsel %vm300, 1, 0
        %v302 = vcvt.s32.f32 %v301
        %303 = vmatprep.subr.mxu0 0.0
        %304 = vmatpush1.xpose.msra.mxu0 %v217
        %305 = vmatprep.subr.mxu0 0.0
        %306 = vmatpush1.xpose.msra.mxu0 %v216
        %307 = vmatprep.subr.mxu0 0.0
        %308 = vmatpush1.xpose.msra.mxu0 %v215
        %309 = vmatprep.subr.mxu0 0.0
        %310 = vmatpush1.xpose.msra.mxu0 %v214
        %311 = vmatprep.subr.mxu0 0.0
        %312 = vmatpush1.xpose.msra.mxu0 %v213
        %313 = vmatprep.subr.mxu0 0.0
        %314 = vmatpush1.xpose.msra.mxu0 %v212
        %315 = vmatprep.subr.mxu0 0.0
        %316 = vmatpush1.xpose.msra.mxu0 %v211
        %317 = vmatprep.subr.mxu0 0.0
        %318 = vmatpush1.xpose.msra.mxu0 %v210
        %319 = vmatprep.subr.mxu0 0.0
        %320 = vmatpush1.xpose.msra.mxu0 %v209
        %321 = vmatprep.subr.mxu0 0.0
        %322 = vmatpush1.xpose.msra.mxu0 %v208
        %323 = vmatprep.subr.mxu0 0.0
        %324 = vmatpush1.xpose.msra.mxu0 %v207
        %325 = vmatprep.subr.mxu0 0.0
        %326 = vmatpush1.xpose.msra.mxu0 %v206
        %327 = vmatprep.subr.mxu0 0.0
        %328 = vmatpush1.xpose.msra.mxu0 %v205
        %329 = vmatprep.subr.mxu0 0.0
        %330 = vmatpush1.xpose.msra.mxu0 %v204
        %331 = vmatprep.subr.mxu0 0.0
        %332 = vmatpush1.xpose.msra.mxu0 %v203
        %333 = vmatprep.subr.mxu0 0.0
        %334 = vmatpush1.xpose.msra.mxu0 %v202
        %335 = vmatprep.subr.mxu0 0.0
        %336 = vmatpush2.xpose.msra.mxu0 0.0
        %337 = vmatprep.subr.mxu0 0.0
        %338 = vmatpush2.xpose.msra.mxu0 0.0
        %339 = vmatprep.subr.mxu0 0.0
        %340 = vmatpush2.xpose.msra.mxu0 0.0
        %341 = vmatprep.subr.mxu0 0.0
        %342 = vmatpush2.xpose.msra.mxu0 0.0
        %343 = vmatprep.subr.mxu0 0.0
        %344 = vmatpush2.xpose.msra.mxu0 0.0
        %345 = vmatprep.subr.mxu0 0.0
        %346 = vmatpush2.xpose.msra.mxu0 0.0
        %347 = vmatprep.subr.mxu0 0.0
        %348 = vmatpush2.xpose.msra.mxu0 0.0
        %349 = vmatprep.subr.mxu0 0.0
        %350 = vmatpush2.xpose.msra.mxu0 0.0
        %351 = vmatprep.subr.mxu0 0.0
        %352 = vmatpush2.xpose.msra.mxu0 0.0
        %353 = vmatprep.subr.mxu0 0.0
        %354 = vmatpush2.xpose.msra.mxu0 0.0
        %355 = vmatprep.subr.mxu0 0.0
        %356 = vmatpush2.xpose.msra.mxu0 0.0
        %357 = vmatprep.subr.mxu0 0.0
        %358 = vmatpush2.xpose.msra.mxu0 0.0
        %359 = vmatprep.subr.mxu0 0.0
        %360 = vmatpush2.xpose.msra.mxu0 0.0
        %361 = vmatprep.subr.mxu0 0.0
        %362 = vmatpush2.xpose.msra.mxu0 0.0
        %363 = vmatprep.subr.mxu0 0.0
        %364 = vmatpush2.xpose.msra.mxu0 0.0
        %365 = vmatprep.subr.mxu0 0.0
        %366 = vmatpush2.xpose.msra.mxu0 0.0
        %367 = vmatprep.mubr.f32.mxu0 0.0
        %368 = vmatmul.mubr.f32.gmra.mxu0 %v302
        %v369 = vpop.f32.mrf.mxu0
        %v370 = vadd.f32 0.0, %v369
        %v371 = vpop.f32.mrf.mxu0
        %372 = vdwg.mxu0
        %373 = vst [vmem:[%s200] sm:$0xff] %v370
        %s374 = sand.u32 %s97, 1
        %s375 = scalar_lea.sflag [#allocation4], %s374
        %s376 = sand.u32 %s97, 1
        %s377 = smul.addr %s376, 8
        %s378 = scalar_lea.vmem [#allocation7], %s377
        // Predicated region
        $region41: #{tpu_custom_call.1} parent=31 // pred_check
          %p379 = pneg %p107
        $region42: #{tpu_custom_call.1} parent=31 // pred_check_branch
          %381 = sbr.rel (%p379) target = $region44
        $region43: #{tpu_custom_call.1} parent=31 // pred_region
          %s383 = ssub.s32 128, 128
          %384 = vsyncadd %s375, %s383
          %s385 = smul.addr %s21, 128
          %s386 = scalar_lea.hbm %s3, %s385
          %s388 = sshll.u32 %s378, 4
          %s389 = int_to_ptr.vmem [resolvable:$true] %s388
          %391 = dma.vmem_to_hbm [thread:$0]  %s389, 128, %s386, %s375
        $region44: #{tpu_custom_call.1} parent=31 // pred_fallthru
          _
      $region32: #{tpu_custom_call.1} parent=5 // pred_fallthru
        _
      %p392 = scmp.le.s32.totalorder 2, %s16
      // Predicated region
      $region45: #{tpu_custom_call.1} parent=5 // pred_check
        %p393 = pneg %p392
      $region46: #{tpu_custom_call.1} parent=5 // pred_check_branch
        %395 = sbr.rel (%p393) target = $region48
      $region47: #{tpu_custom_call.1} parent=5 // pred_region
        %s396 = ssub.s32 %s16, 2
        // Predicated region
        $region49: #{tpu_custom_call.1} parent=47 // pred_check
          %p397 = pneg %p113
        $region50: #{tpu_custom_call.1} parent=47 // pred_check_branch
          %399 = sbr.rel (%p397) target = $region52
        $region51: #{tpu_custom_call.1} parent=47 // pred_region
          %s400 = sand.u32 %s98, 1
          %s401 = scalar_lea.sflag [#allocation4], %s400
          %s402 = sand.u32 %s98, 1
          %s403 = smul.addr %s402, 8
          %s404 = scalar_lea.vmem [#allocation7], %s403
          %405 = dma.done %s401, 128
        $region52: #{tpu_custom_call.1} parent=47 // pred_fallthru
          _
      $region48: #{tpu_custom_call.1} parent=5 // pred_fallthru
        _
    $region6: #{tpu_custom_call.1} parent=1 // loop_footer
      %s20 = sadd.s32 1, %s16
    $region7: #{tpu_custom_call.1} parent=1 // loop_footer_branch
      %15 = sbr.rel target = $region3
    $region8: #{tpu_custom_call.1} parent=1 // loop_exit
      _
    %406 = vsyncpa [#allocation3], 1
    %s407 = scalar_lea.sflag [#allocation3], 1
    %408 = vsyncpa %s407, 1
    %409 = vsyncpa [#allocation6], 1
    %410 = vsyncpa [#allocation4], 1
    %s411 = scalar_lea.sflag [#allocation4], 1
    %412 = vsyncpa %s411, 1

</llo_original>
